<compile_context>
chip_gen: v7x
topology: tpu7x:2x2x1
jax: 0.10.0
libtpu: 0.0.40
codegen_flags: <defaults>
</compile_context>

<pallas_src>
import numpy as np

import jax
import jax.numpy as jnp
from jax.experimental import pallas as pl
from jax.experimental.pallas import tpu as pltpu

OUT_FEATURES = 512   # CLIP ViT-B/32 embedding dim (fixed in the module)
EMBED_WIDTH = 128    # internal width of the synthetic visual encoder
LANE = 128
SUBLANE = 8
MAX_ROW_TILE = 256   # row tile cap: keeps double-buffered tiles tiny vs VMEM


def _round_up(x, m):
    return ((x + m - 1) // m) * m


# ----------------------------- Pallas kernel -------------------------------

def _fused_forward_kernel(pooled_ref, w_emb_ref, w_proj_ref, b_enc_ref,
                          w_head_ref, b_head_ref, out_ref):
    """pooled[TM, Dp] (bf16) -> category logits[TM, padded_classes] (f32).

    Three chained MXU matmuls (patch embed, 512-d projection, fused heads of
    one category) in a single body; the intermediate embedding stays on-chip.
    bf16 operands, f32 accumulation, f32 bias adds.
    """
    h = jnp.dot(pooled_ref[...], w_emb_ref[...],
                preferred_element_type=jnp.float32)
    emb = jnp.dot(h.astype(jnp.bfloat16), w_proj_ref[...],
                  preferred_element_type=jnp.float32) + b_enc_ref[...]
    logits = jnp.dot(emb.astype(jnp.bfloat16), w_head_ref[...],
                     preferred_element_type=jnp.float32) + b_head_ref[...]
    out_ref[...] = logits.astype(out_ref.dtype)


def _vmem_limit_bytes(tm, patch_dim_p, padded_classes):
    bf2, f4 = 2, 4
    act_in = 2 * tm * patch_dim_p * bf2                     # double-buffered
    act_out = 2 * tm * padded_classes * f4                  # double-buffered
    weights = 2 * (patch_dim_p * EMBED_WIDTH * bf2
                   + EMBED_WIDTH * OUT_FEATURES * bf2
                   + OUT_FEATURES * f4
                   + OUT_FEATURES * padded_classes * bf2
                   + padded_classes * f4)
    margin = 8 << 20                                        # internal scratch
    return min(act_in + act_out + weights + margin, 64 << 20)


def _fused_forward(pooled, w_emb, w_proj, b_enc, w_head, b_head, tm):
    b_pad, dp = pooled.shape
    n_out = w_head.shape[1]
    grid = (b_pad // tm,)
    return pl.pallas_call(
        _fused_forward_kernel,
        out_shape=jax.ShapeDtypeStruct((b_pad, n_out), jnp.float32),
        grid_spec=pltpu.PrefetchScalarGridSpec(
            num_scalar_prefetch=0,
            grid=grid,
            in_specs=[
                # row-tiled activations
                pl.BlockSpec((tm, dp), lambda i: (i, 0)),
                # resident weights / biases (constant index maps)
                pl.BlockSpec(w_emb.shape, lambda i: (0, 0)),
                pl.BlockSpec(w_proj.shape, lambda i: (0, 0)),
                pl.BlockSpec(b_enc.shape, lambda i: (0, 0)),
                pl.BlockSpec(w_head.shape, lambda i: (0, 0)),
                pl.BlockSpec(b_head.shape, lambda i: (0, 0)),
            ],
            out_specs=pl.BlockSpec((tm, n_out), lambda i: (i, 0)),
        ),
        compiler_params=pltpu.CompilerParams(
            dimension_semantics=("parallel",),
            vmem_limit_bytes=_vmem_limit_bytes(tm, dp, n_out),
        ),
    )(pooled, w_emb, w_proj, b_enc, w_head, b_head)


# ------------------------------ model wrapper ------------------------------

def _linear_init(key, fan_in, fan_out):
    # matches torch.nn.Linear default init: U(-1/sqrt(fan_in), 1/sqrt(fan_in))
    kw, kb = jax.random.split(key)
    bound = 1.0 / np.sqrt(fan_in)
    w = jax.random.uniform(kw, (fan_in, fan_out), jnp.float32, -bound, bound)
    b = jax.random.uniform(kb, (1, fan_out), jnp.float32, -bound, bound)
    return w, b


class FashionCLIPClassifierPallas:
    """Pallas re-implementation of FashionCLIPClassifier (default flags)."""

    def __init__(self, config, in_channels=3, image_size=32, patch_size=16,
                 seed=0):
        self.config = config
        self.cats = list(config.keys())
        self.mapping = {k: f"{k.lower()}_fcs" for k in config}
        self.in_channels = in_channels
        self.image_size = image_size
        self.patch_size = patch_size
        self.num_patches = (image_size // patch_size) ** 2
        self.patch_dim = in_channels * patch_size * patch_size
        self.patch_dim_p = _round_up(self.patch_dim, LANE)  # lane-dense K

        key = jax.random.PRNGKey(seed)
        k_emb, k_proj, k_heads = jax.random.split(key, 3)

        # synthetic visual encoder params (TODO(synk): stands in for CLIP ViT)
        w_emb_f32, b_emb_f32 = _linear_init(k_emb, self.patch_dim, EMBED_WIDTH)
        w_proj_f32, b_proj_f32 = _linear_init(k_proj, EMBED_WIDTH,
                                              OUT_FEATURES)

        # fold the patch-embed bias through the projection:
        #   mean_p(x@W+b) = mean_p(x)@W + b  and  (h+b)@Wp + bp = h@Wp + (b@Wp+bp)
        b_enc_f32 = b_emb_f32 @ w_proj_f32 + b_proj_f32       # (1, 512) f32

        # keep exact f32 copies for the pure-JAX reference path
        self._ref = dict(w_emb=w_emb_f32, b_emb=b_emb_f32,
                         w_proj=w_proj_f32, b_proj=b_proj_f32)

        # kernel weights: bf16 MXU operands, zero-padded K to a lane multiple
        w_emb_pad = jnp.zeros((self.patch_dim_p, EMBED_WIDTH), jnp.float32)
        w_emb_pad = w_emb_pad.at[:self.patch_dim, :].set(w_emb_f32)
        self.w_emb = w_emb_pad.astype(jnp.bfloat16)
        self.w_proj = w_proj_f32.astype(jnp.bfloat16)
        self.b_enc = b_enc_f32                                 # f32 bias

        # per-category classification heads, fused + lane-padded to 128
        self.heads = {}
        for ci, (cat, attrs) in enumerate(config.items()):
            sizes = [len(v) for v in attrs.values()]
            total = sum(sizes)
            padded = max(LANE, _round_up(total, LANE))
            kcat = jax.random.fold_in(k_heads, ci)
            w = jnp.zeros((OUT_FEATURES, padded), jnp.float32)
            b = jnp.zeros((1, padded), jnp.float32)
            off = 0
            for hi, n in enumerate(sizes):
                wh, bh = _linear_init(jax.random.fold_in(kcat, hi),
                                      OUT_FEATURES, n)
                w = w.at[:, off:off + n].set(wh)
                b = b.at[:, off:off + n].set(bh)
                off += n
            self.heads[cat] = dict(w=w.astype(jnp.bfloat16),   # bf16 MXU weight
                                   b=b,                        # f32 bias
                                   w_f32=w, sizes=sizes)

    # ----- glue: NCHW image -> per-image mean-pooled patch vector -----
    def _pool_patches(self, x):
        B, C, H, W = x.shape
        p = self.patch_size
        xp = x.reshape(B, C, H // p, p, W // p, p)
        xp = xp.transpose(0, 2, 4, 1, 3, 5)          # [B, Hp, Wp, C, p, p]
        xp = xp.reshape(B, self.num_patches, self.patch_dim)
        # TODO(synk): pre-pooling before the patch-embed matmul is only valid
        # because the stand-in encoder is linear; drop this when the real
        # (nonlinear) CLIP ViT replaces it.
        pooled = xp.mean(axis=1)                     # [B, patch_dim]
        if self.patch_dim_p != self.patch_dim:
            pooled = jnp.pad(pooled,
                             ((0, 0), (0, self.patch_dim_p - self.patch_dim)))
        return pooled

    def forward(self, x, category):
        if self.mapping.get(category, None) is None:
            raise ValueError(f"Invalid Category - {category}")
        # b_norm is None and inter_layer is None at default flags -> skipped
        head = self.heads[category]

        B = x.shape[0]
        pooled = self._pool_patches(x).astype(jnp.bfloat16)
        if B <= MAX_ROW_TILE:
            tm = _round_up(B, SUBLANE)               # single tile, min sublane
        else:
            tm = MAX_ROW_TILE                        # pipelined row grid
        b_pad = _round_up(B, tm)
        if b_pad != B:
            pooled = jnp.pad(pooled, ((0, b_pad - B), (0, 0)))

        logits = _fused_forward(pooled, self.w_emb, self.w_proj, self.b_enc,
                                head["w"], head["b"], tm)[:B]

        out, off = [], 0
        for n in head["sizes"]:
            out.append(logits[:, off:off + n])
            off += n
        return out

    # ----- pure-JAX f32 reference (original, un-folded math) -----
    def forward_ref(self, x, category):
        B, C, H, W = x.shape
        p = self.patch_size
        xp = x.reshape(B, C, H // p, p, W // p, p)
        xp = xp.transpose(0, 2, 4, 1, 3, 5)
        xp = xp.reshape(B * self.num_patches, self.patch_dim)
        h = xp @ self._ref["w_emb"] + self._ref["b_emb"]
        h = h.reshape(B, self.num_patches, EMBED_WIDTH).mean(axis=1)
        emb = h @ self._ref["w_proj"] + self._ref["b_proj"]
        head = self.heads[category]
        logits = emb @ head["w_f32"] + head["b"]
        out, off = [], 0
        for n in head["sizes"]:
            out.append(logits[:, off:off + n])
            off += n
        return out


# ---------------------------------- main -----------------------------------

if __name__ == "__main__":
    CONFIG = {
        "Tops": {
            "color": ["red", "green", "blue", "black", "white"],
            "pattern": ["solid", "striped", "floral", "dotted", "plaid",
                        "check", "graphic"],
        },
        "Bottoms": {
            "length": ["short", "knee", "full"],
            "fit": ["slim", "regular", "loose", "baggy"],
        },
    }

    model = FashionCLIPClassifierPallas(CONFIG, in_channels=3, image_size=32,
                                        patch_size=16, seed=0)

    key = jax.random.PRNGKey(0)
    x = jax.random.normal(key, (2, 3, 32, 32), dtype=jnp.float32)

    outs = model.forward(x, "Tops")
    outs = [jax.block_until_ready(o) for o in outs]

    # bf16 MXU operands vs f32 reference -> loosened tolerance (values ~O(0.1))
    refs = model.forward_ref(x, "Tops")
    for o, r in zip(outs, refs):
        np.testing.assert_allclose(np.asarray(o), np.asarray(r),
                                   rtol=1e-2, atol=1e-2)

    assert [o.shape for o in outs] == [(2, 5), (2, 7)]

    # second category exercises a different fused head
    outs_b = model.forward(x, "Bottoms")
    outs_b = [jax.block_until_ready(o) for o in outs_b]
    refs_b = model.forward_ref(x, "Bottoms")
    for o, r in zip(outs_b, refs_b):
        np.testing.assert_allclose(np.asarray(o), np.asarray(r),
                                   rtol=1e-2, atol=1e-2)
    assert [o.shape for o in outs_b] == [(2, 3), (2, 4)]

    print("KERNEL_OK")
</pallas_src>

<mosaic_0001>
module attributes {stable_mosaic.version = 11 : i64} {
  func.func @_fused_forward_kernel(%arg0: i32, %arg1: memref<8x768xbf16, #tpu.memory_space<vmem>>, %arg2: memref<768x128xbf16, #tpu.memory_space<vmem>>, %arg3: memref<128x512xbf16, #tpu.memory_space<vmem>>, %arg4: memref<1x512xf32, #tpu.memory_space<vmem>>, %arg5: memref<512x128xbf16, #tpu.memory_space<vmem>>, %arg6: memref<1x128xf32, #tpu.memory_space<vmem>>, %arg7: memref<8x128xf32, #tpu.memory_space<vmem>>) attributes {dimension_semantics = [#tpu.dimension_semantics<parallel>], iteration_bounds = array<i64: 1>, scalar_prefetch = 0 : i64, scratch_operands = 0 : i64, tpu.core_type = #tpu.core_type<tc>, window_params = [{transform_indices = @transform_0, window_bounds = array<i64: 8, 768>}, {pipeline_mode = #tpu.pipeline_mode<synchronous>, transform_indices = @transform_1, window_bounds = array<i64: 768, 128>}, {pipeline_mode = #tpu.pipeline_mode<synchronous>, transform_indices = @transform_2, window_bounds = array<i64: 128, 512>}, {pipeline_mode = #tpu.pipeline_mode<synchronous>, transform_indices = @transform_3, window_bounds = array<i64: 1, 512>}, {pipeline_mode = #tpu.pipeline_mode<synchronous>, transform_indices = @transform_4, window_bounds = array<i64: 512, 128>}, {pipeline_mode = #tpu.pipeline_mode<synchronous>, transform_indices = @transform_5, window_bounds = array<i64: 1, 128>}, {transform_indices = @transform_6, window_bounds = array<i64: 8, 128>}]} {
    %c0 = arith.constant 0 : index
    %c0_0 = arith.constant 0 : index
    %0 = vector.load %arg1[%c0, %c0_0] : memref<8x768xbf16, #tpu.memory_space<vmem>>, vector<8x768xbf16>
    %c0_1 = arith.constant 0 : index
    %c0_2 = arith.constant 0 : index
    %1 = vector.load %arg2[%c0_1, %c0_2] : memref<768x128xbf16, #tpu.memory_space<vmem>>, vector<768x128xbf16>
    %cst = arith.constant dense<0.000000e+00> : vector<8x128xf32>
    %2 = tpu.matmul %0, %1, %cst {dimension_numbers = #tpu.dot_dimension_numbers<[1], [0], [0], [1], [0, 0, 1, 1], [], []>} : vector<8x768xbf16>, vector<768x128xbf16>, vector<8x128xf32> -> vector<8x128xf32>
    %3 = arith.truncf %2 : vector<8x128xf32> to vector<8x128xbf16>
    %c0_3 = arith.constant 0 : index
    %c0_4 = arith.constant 0 : index
    %4 = vector.load %arg3[%c0_3, %c0_4] : memref<128x512xbf16, #tpu.memory_space<vmem>>, vector<128x512xbf16>
    %cst_5 = arith.constant dense<0.000000e+00> : vector<8x512xf32>
    %5 = tpu.matmul %3, %4, %cst_5 {dimension_numbers = #tpu.dot_dimension_numbers<[1], [0], [0], [1], [0, 0, 1, 1], [], []>} : vector<8x128xbf16>, vector<128x512xbf16>, vector<8x512xf32> -> vector<8x512xf32>
    %c0_6 = arith.constant 0 : index
    %c0_7 = arith.constant 0 : index
    %6 = vector.load %arg4[%c0_6, %c0_7] : memref<1x512xf32, #tpu.memory_space<vmem>>, vector<1x512xf32>
    %7 = vector.broadcast %6 : vector<1x512xf32> to vector<8x512xf32>
    %8 = arith.addf %5, %7 : vector<8x512xf32>
    %9 = arith.truncf %8 : vector<8x512xf32> to vector<8x512xbf16>
    %c0_8 = arith.constant 0 : index
    %c0_9 = arith.constant 0 : index
    %10 = vector.load %arg5[%c0_8, %c0_9] : memref<512x128xbf16, #tpu.memory_space<vmem>>, vector<512x128xbf16>
    %cst_10 = arith.constant dense<0.000000e+00> : vector<8x128xf32>
    %11 = tpu.matmul %9, %10, %cst_10 {dimension_numbers = #tpu.dot_dimension_numbers<[1], [0], [0], [1], [0, 0, 1, 1], [], []>} : vector<8x512xbf16>, vector<512x128xbf16>, vector<8x128xf32> -> vector<8x128xf32>
    %c0_11 = arith.constant 0 : index
    %c0_12 = arith.constant 0 : index
    %12 = vector.load %arg6[%c0_11, %c0_12] : memref<1x128xf32, #tpu.memory_space<vmem>>, vector<1x128xf32>
    %13 = vector.broadcast %12 : vector<1x128xf32> to vector<8x128xf32>
    %14 = arith.addf %11, %13 : vector<8x128xf32>
    %c0_13 = arith.constant 0 : index
    %c0_14 = arith.constant 0 : index
    %15 = vector.load %arg7[%c0_13, %c0_14] : memref<8x128xf32, #tpu.memory_space<vmem>>, vector<8x128xf32>
    tpu.vector_store %arg7[%c0_13, %c0_14], %14 {strides = array<i32>} : memref<8x128xf32, #tpu.memory_space<vmem>>, vector<8x128xf32>,
    return
  }
  func.func @transform_0(%arg0: i32) -> (i32, i32) {
    %c0_i32 = arith.constant 0 : i32
    %c0_i32_0 = arith.constant 0 : i32
    return %arg0, %c0_i32 : i32, i32
  }
  func.func @transform_1(%arg0: i32) -> (i32, i32) {
    %c0_i32 = arith.constant 0 : i32
    %c0_i32_0 = arith.constant 0 : i32
    %c0_i32_1 = arith.constant 0 : i32
    return %c0_i32, %c0_i32_0 : i32, i32
  }
  func.func @transform_2(%arg0: i32) -> (i32, i32) {
    %c0_i32 = arith.constant 0 : i32
    %c0_i32_0 = arith.constant 0 : i32
    %c0_i32_1 = arith.constant 0 : i32
    return %c0_i32, %c0_i32_0 : i32, i32
  }
  func.func @transform_3(%arg0: i32) -> (i32, i32) {
    %c0_i32 = arith.constant 0 : i32
    %c0_i32_0 = arith.constant 0 : i32
    %c0_i32_1 = arith.constant 0 : i32
    return %c0_i32, %c0_i32_0 : i32, i32
  }
  func.func @transform_4(%arg0: i32) -> (i32, i32) {
    %c0_i32 = arith.constant 0 : i32
    %c0_i32_0 = arith.constant 0 : i32
    %c0_i32_1 = arith.constant 0 : i32
    return %c0_i32, %c0_i32_0 : i32, i32
  }
  func.func @transform_5(%arg0: i32) -> (i32, i32) {
    %c0_i32 = arith.constant 0 : i32
    %c0_i32_0 = arith.constant 0 : i32
    %c0_i32_1 = arith.constant 0 : i32
    return %c0_i32, %c0_i32_0 : i32, i32
  }
  func.func @transform_6(%arg0: i32) -> (i32, i32) {
    %c0_i32 = arith.constant 0 : i32
    %c0_i32_0 = arith.constant 0 : i32
    return %arg0, %c0_i32 : i32, i32
  }
}

</mosaic_0001>

<llo_original>
// kernel: tpu_custom_call.1
$region0: #{tpu_custom_call.1}
  #allocation0 [shape = 'u32[]', space=smem, size = 0x4, offset = 0x4, fixed_abs, tag = 'smem constant byte address 0x4 - core index']
  #allocation1 [shape = 'u32[144,128]{1,0:T(1,128)}', space=vmem, size = 0x12000, scoped, tag = 'internal scratch']
  %s0 = inlined_call_operand.hbm [shape: bf16[8,768], index: 0, kind: input, shape index: {}]
  %s1 = inlined_call_operand.hbm [shape: bf16[768,128], index: 1, kind: input, shape index: {}]
  %s2 = inlined_call_operand.hbm [shape: bf16[128,512], index: 2, kind: input, shape index: {}]
  %s3 = inlined_call_operand.vmem [shape: f32[1,512], index: 3, kind: input, shape index: {}]
  %s4 = inlined_call_operand.hbm [shape: bf16[512,128], index: 4, kind: input, shape index: {}]
  %s5 = inlined_call_operand.vmem [shape: f32[1,128], index: 5, kind: input, shape index: {}]
  %s6 = inlined_call_operand.hbm [shape: f32[8,128], index: 6, kind: output, shape index: {}]
  %s7 = sld [smem:[#allocation0]]
  $region50: #{tpu_custom_call.1} parent=0
    _
  %s9 = ssub.s32 1, %s7
  %s10 = scalar_select 0, %s9, %s7
  $region1: #{tpu_custom_call.1} parent=0
    #allocation2 [shape = 'u8[12288]{0}', space=vmem, size = 0x3000, scoped, tag = 'input window, operand 0, single buffered']
    #allocation3 [shape = 's32[1]{0}', space=sflag, size = 0x4, scoped, tag = 'scoped memory for tpu_custom_call.1']
    #allocation4 [shape = 's32[1]{0}', space=sflag, size = 0x4, scoped, tag = 'scoped memory for tpu_custom_call.1']
    #allocation5 [shape = 'u8[196608]{0}', space=vmem, size = 0x30000, scoped, tag = 'input window, operand 1, single buffered']
    #allocation6 [shape = 's32[1]{0}', space=sflag, size = 0x4, scoped, tag = 'scoped memory for tpu_custom_call.1']
    #allocation7 [shape = 'u8[131072]{0}', space=vmem, size = 0x20000, scoped, tag = 'input window, operand 2, single buffered']
    #allocation8 [shape = 'u8[131072]{0}', space=vmem, size = 0x20000, scoped, tag = 'input window, operand 4, single buffered']
    #allocation9 [shape = 's32[1]{0}', space=sflag, size = 0x4, scoped, tag = 'scoped memory for tpu_custom_call.1']
    #allocation10 [shape = 'u8[4096]{0}', space=vmem, size = 0x1000, scoped, tag = 'output window, operand 0, single buffered']
    %11 = vsyncpa [#allocation3], 0
    %12 = vsyncpa [#allocation6], 0
    %13 = vsyncpa [#allocation9], 0
    %14 = vsyncpa [#allocation4], 0
    // Predicated region
    $region2: #{tpu_custom_call.1} parent=1 // pred_check
      _
    $region3: #{tpu_custom_call.1} parent=1 // pred_check_branch
      %16 = sbr.rel (0) target = $region5
    $region4: #{tpu_custom_call.1} parent=1 // pred_region
      %s18 = ssub.s32 384, 384
      %19 = vsyncadd [#allocation3], %s18
      %s21 = sshll.u32 [#allocation2], 4
      %s22 = int_to_ptr.vmem [resolvable:$true] %s21
      %24 = dma.hbm_to_vmem [thread:$0]  %s0, 384, %s22, [#allocation3]
    $region5: #{tpu_custom_call.1} parent=1 // pred_fallthru
      _
    // Predicated region
    $region6: #{tpu_custom_call.1} parent=1 // pred_check
      _
    $region7: #{tpu_custom_call.1} parent=1 // pred_check_branch
      %26 = sbr.rel (0) target = $region9
    $region8: #{tpu_custom_call.1} parent=1 // pred_region
      %s28 = ssub.s32 6144, 6144
      %29 = vsyncadd [#allocation6], %s28
      %s30 = sshll.u32 [#allocation5], 4
      %s31 = int_to_ptr.vmem [resolvable:$true] %s30
      %36 = dma.hbm_to_vmem [thread:$0]  %s1, 6144, %s31, [#allocation6], 64, 64, 4
    $region9: #{tpu_custom_call.1} parent=1 // pred_fallthru
      _
    // Predicated region
    $region10: #{tpu_custom_call.1} parent=1 // pred_check
      _
    $region11: #{tpu_custom_call.1} parent=1 // pred_check_branch
      %38 = sbr.rel (0) target = $region13
    $region12: #{tpu_custom_call.1} parent=1 // pred_region
      %s40 = ssub.s32 4096, 4096
      %41 = vsyncadd [#allocation6], %s40
      %s42 = sshll.u32 [#allocation7], 4
      %s43 = int_to_ptr.vmem [resolvable:$true] %s42
      %48 = dma.hbm_to_vmem [thread:$0]  %s2, 4096, %s43, [#allocation6], 256, 256, 16
    $region13: #{tpu_custom_call.1} parent=1 // pred_fallthru
      _
    // Predicated region
    $region14: #{tpu_custom_call.1} parent=1 // pred_check
      _
    $region15: #{tpu_custom_call.1} parent=1 // pred_check_branch
      %50 = sbr.rel (0) target = $region17
    $region16: #{tpu_custom_call.1} parent=1 // pred_region
      _
    $region17: #{tpu_custom_call.1} parent=1 // pred_fallthru
      _
    // Predicated region
    $region18: #{tpu_custom_call.1} parent=1 // pred_check
      _
    $region19: #{tpu_custom_call.1} parent=1 // pred_check_branch
      %52 = sbr.rel (0) target = $region21
    $region20: #{tpu_custom_call.1} parent=1 // pred_region
      %s54 = ssub.s32 4096, 4096
      %55 = vsyncadd [#allocation9], %s54
      %s56 = sshll.u32 [#allocation8], 4
      %s57 = int_to_ptr.vmem [resolvable:$true] %s56
      %62 = dma.hbm_to_vmem [thread:$0]  %s4, 4096, %s57, [#allocation9], 64, 64, 4
    $region21: #{tpu_custom_call.1} parent=1 // pred_fallthru
      _
    // Predicated region
    $region22: #{tpu_custom_call.1} parent=1 // pred_check
      _
    $region23: #{tpu_custom_call.1} parent=1 // pred_check_branch
      %64 = sbr.rel (0) target = $region25
    $region24: #{tpu_custom_call.1} parent=1 // pred_region
      _
    $region25: #{tpu_custom_call.1} parent=1 // pred_fallthru
      _
    // Predicated region
    $region26: #{tpu_custom_call.1} parent=1 // pred_check
      _
    $region27: #{tpu_custom_call.1} parent=1 // pred_check_branch
      %66 = sbr.rel (0) target = $region29
    $region28: #{tpu_custom_call.1} parent=1 // pred_region
      %67 = dma.done [#allocation3], 384
    $region29: #{tpu_custom_call.1} parent=1 // pred_fallthru
      _
    // Predicated region
    $region30: #{tpu_custom_call.1} parent=1 // pred_check
      _
    $region31: #{tpu_custom_call.1} parent=1 // pred_check_branch
      %69 = sbr.rel (0) target = $region33
    $region32: #{tpu_custom_call.1} parent=1 // pred_region
      %70 = dma.done [#allocation6], 6144
    $region33: #{tpu_custom_call.1} parent=1 // pred_fallthru
      _
    // Predicated region
    $region34: #{tpu_custom_call.1} parent=1 // pred_check
      _
    $region35: #{tpu_custom_call.1} parent=1 // pred_check_branch
      %72 = sbr.rel (0) target = $region37
    $region36: #{tpu_custom_call.1} parent=1 // pred_region
      %73 = dma.done [#allocation6], 4096
    $region37: #{tpu_custom_call.1} parent=1 // pred_fallthru
      _
    // Predicated region
    $region38: #{tpu_custom_call.1} parent=1 // pred_check
      _
    $region39: #{tpu_custom_call.1} parent=1 // pred_check_branch
      %75 = sbr.rel (0) target = $region41
    $region40: #{tpu_custom_call.1} parent=1 // pred_region
      %76 = dma.done [#allocation9], 4096
    $region41: #{tpu_custom_call.1} parent=1 // pred_fallthru
      _
    %v78 = vld [vmem:[#allocation2] sm:$0xff]
    %v79 = vld [vmem:[#allocation2 + $0x8] sm:$0xff]
    %v80 = vld [vmem:[#allocation2 + $0x10] sm:$0xff]
    %v81 = vld [vmem:[#allocation5] sm:$0xf]
    %v82 = vld [vmem:[#allocation5 + $0x4] sm:$0xf]
    %v83 = vld [vmem:[#allocation5 + $0x8] sm:$0xf]
    %v84 = vld [vmem:[#allocation5 + $0xc] sm:$0xf]
    %v85 = vld [vmem:[#allocation5 + $0x10] sm:$0xf]
    %v86 = vld [vmem:[#allocation5 + $0x14] sm:$0xf]
    %v87 = vld [vmem:[#allocation5 + $0x18] sm:$0xf]
    %v88 = vld [vmem:[#allocation5 + $0x1c] sm:$0xf]
    %v89 = vld [vmem:[#allocation5 + $0x20] sm:$0xf]
    %v90 = vld [vmem:[#allocation5 + $0x24] sm:$0xf]
    %v91 = vld [vmem:[#allocation5 + $0x28] sm:$0xf]
    %v92 = vld [vmem:[#allocation5 + $0x2c] sm:$0xf]
    %v93 = vld [vmem:[#allocation5 + $0x30] sm:$0xf]
    %v94 = vld [vmem:[#allocation5 + $0x34] sm:$0xf]
    %v95 = vld [vmem:[#allocation5 + $0x38] sm:$0xf]
    %v96 = vld [vmem:[#allocation5 + $0x3c] sm:$0xf]
    %v97 = vld [vmem:[#allocation5 + $0x40] sm:$0xf]
    %v98 = vld [vmem:[#allocation5 + $0x44] sm:$0xf]
    %v99 = vld [vmem:[#allocation5 + $0x48] sm:$0xf]
    %v100 = vld [vmem:[#allocation5 + $0x4c] sm:$0xf]
    %v101 = vld [vmem:[#allocation5 + $0x50] sm:$0xf]
    %v102 = vld [vmem:[#allocation5 + $0x54] sm:$0xf]
    %v103 = vld [vmem:[#allocation5 + $0x58] sm:$0xf]
    %v104 = vld [vmem:[#allocation5 + $0x5c] sm:$0xf]
    %v105 = vld [vmem:[#allocation5 + $0x60] sm:$0xf]
    %v106 = vld [vmem:[#allocation5 + $0x64] sm:$0xf]
    %v107 = vld [vmem:[#allocation5 + $0x68] sm:$0xf]
    %v108 = vld [vmem:[#allocation5 + $0x6c] sm:$0xf]
    %v109 = vld [vmem:[#allocation5 + $0x70] sm:$0xf]
    %v110 = vld [vmem:[#allocation5 + $0x74] sm:$0xf]
    %v111 = vld [vmem:[#allocation5 + $0x78] sm:$0xf]
    %v112 = vld [vmem:[#allocation5 + $0x7c] sm:$0xf]
    %v113 = vld [vmem:[#allocation5 + $0x80] sm:$0xf]
    %v114 = vld [vmem:[#allocation5 + $0x84] sm:$0xf]
    %v115 = vld [vmem:[#allocation5 + $0x88] sm:$0xf]
    %v116 = vld [vmem:[#allocation5 + $0x8c] sm:$0xf]
    %v117 = vld [vmem:[#allocation5 + $0x90] sm:$0xf]
    %v118 = vld [vmem:[#allocation5 + $0x94] sm:$0xf]
    %v119 = vld [vmem:[#allocation5 + $0x98] sm:$0xf]
    %v120 = vld [vmem:[#allocation5 + $0x9c] sm:$0xf]
    %v121 = vld [vmem:[#allocation5 + $0xa0] sm:$0xf]
    %v122 = vld [vmem:[#allocation5 + $0xa4] sm:$0xf]
    %v123 = vld [vmem:[#allocation5 + $0xa8] sm:$0xf]
    %v124 = vld [vmem:[#allocation5 + $0xac] sm:$0xf]
    %v125 = vld [vmem:[#allocation5 + $0xb0] sm:$0xf]
    %v126 = vld [vmem:[#allocation5 + $0xb4] sm:$0xf]
    %v127 = vld [vmem:[#allocation5 + $0xb8] sm:$0xf]
    %v128 = vld [vmem:[#allocation5 + $0xbc] sm:$0xf]
    %v129 = vld [vmem:[#allocation5 + $0xc0] sm:$0xf]
    %v130 = vld [vmem:[#allocation5 + $0xc4] sm:$0xf]
    %v131 = vld [vmem:[#allocation5 + $0xc8] sm:$0xf]
    %v132 = vld [vmem:[#allocation5 + $0xcc] sm:$0xf]
    %v133 = vld [vmem:[#allocation5 + $0xd0] sm:$0xf]
    %v134 = vld [vmem:[#allocation5 + $0xd4] sm:$0xf]
    %v135 = vld [vmem:[#allocation5 + $0xd8] sm:$0xf]
    %v136 = vld [vmem:[#allocation5 + $0xdc] sm:$0xf]
    %v137 = vld [vmem:[#allocation5 + $0xe0] sm:$0xf]
    %v138 = vld [vmem:[#allocation5 + $0xe4] sm:$0xf]
    %v139 = vld [vmem:[#allocation5 + $0xe8] sm:$0xf]
    %v140 = vld [vmem:[#allocation5 + $0xec] sm:$0xf]
    %v141 = vld [vmem:[#allocation5 + $0xf0] sm:$0xf]
    %v142 = vld [vmem:[#allocation5 + $0xf4] sm:$0xf]
    %v143 = vld [vmem:[#allocation5 + $0xf8] sm:$0xf]
    %v144 = vld [vmem:[#allocation5 + $0xfc] sm:$0xf]
    %v145 = vld [vmem:[#allocation5 + $0x100] sm:$0xf]
    %v146 = vld [vmem:[#allocation5 + $0x104] sm:$0xf]
    %v147 = vld [vmem:[#allocation5 + $0x108] sm:$0xf]
    %v148 = vld [vmem:[#allocation5 + $0x10c] sm:$0xf]
    %v149 = vld [vmem:[#allocation5 + $0x110] sm:$0xf]
    %v150 = vld [vmem:[#allocation5 + $0x114] sm:$0xf]
    %v151 = vld [vmem:[#allocation5 + $0x118] sm:$0xf]
    %v152 = vld [vmem:[#allocation5 + $0x11c] sm:$0xf]
    %v153 = vld [vmem:[#allocation5 + $0x120] sm:$0xf]
    %v154 = vld [vmem:[#allocation5 + $0x124] sm:$0xf]
    %v155 = vld [vmem:[#allocation5 + $0x128] sm:$0xf]
    %v156 = vld [vmem:[#allocation5 + $0x12c] sm:$0xf]
    %v157 = vld [vmem:[#allocation5 + $0x130] sm:$0xf]
    %v158 = vld [vmem:[#allocation5 + $0x134] sm:$0xf]
    %v159 = vld [vmem:[#allocation5 + $0x138] sm:$0xf]
    %v160 = vld [vmem:[#allocation5 + $0x13c] sm:$0xf]
    %v161 = vld [vmem:[#allocation5 + $0x140] sm:$0xf]
    %v162 = vld [vmem:[#allocation5 + $0x144] sm:$0xf]
    %v163 = vld [vmem:[#allocation5 + $0x148] sm:$0xf]
    %v164 = vld [vmem:[#allocation5 + $0x14c] sm:$0xf]
    %v165 = vld [vmem:[#allocation5 + $0x150] sm:$0xf]
    %v166 = vld [vmem:[#allocation5 + $0x154] sm:$0xf]
    %v167 = vld [vmem:[#allocation5 + $0x158] sm:$0xf]
    %v168 = vld [vmem:[#allocation5 + $0x15c] sm:$0xf]
    %v169 = vld [vmem:[#allocation5 + $0x160] sm:$0xf]
    %v170 = vld [vmem:[#allocation5 + $0x164] sm:$0xf]
    %v171 = vld [vmem:[#allocation5 + $0x168] sm:$0xf]
    %v172 = vld [vmem:[#allocation5 + $0x16c] sm:$0xf]
    %v173 = vld [vmem:[#allocation5 + $0x170] sm:$0xf]
    %v174 = vld [vmem:[#allocation5 + $0x174] sm:$0xf]
    %v175 = vld [vmem:[#allocation5 + $0x178] sm:$0xf]
    %v176 = vld [vmem:[#allocation5 + $0x17c] sm:$0xf]
    %v180 = vunpack.c.l.b16 %v78
    %v181 = vunpack.c.h.b16 %v78
    %v182 = vunpack.c.l.b16 %v79
    %v183 = vunpack.c.h.b16 %v79
    %v184 = vunpack.c.l.b16 %v80
    %v185 = vunpack.c.h.b16 %v80
    %v186 = vpack.c.b16 %v180, %v180
    %v187 = vpack.c.b16 %v181, %v181
    %v188 = vpack.c.b16 %v182, %v182
    %v189 = vpack.c.b16 %v183, %v183
    %v190 = vpack.c.b16 %v184, %v184
    %v191 = vpack.c.b16 %v185, %v185
    %v294 = vunpack.c.l.b16 %v81
    %v295 = vunpack.c.l.b16 %v82
    %v296 = vunpack.c.l.b16 %v83
    %v297 = vunpack.c.l.b16 %v84
    %v298 = vunpack.c.l.b16 %v85
    %v299 = vunpack.c.l.b16 %v86
    %v300 = vunpack.c.l.b16 %v87
    %v301 = vunpack.c.l.b16 %v88
    %v302 = vunpack.c.l.b16 %v89
    %v303 = vunpack.c.l.b16 %v90
    %v304 = vunpack.c.l.b16 %v91
    %v305 = vunpack.c.l.b16 %v92
    %v306 = vunpack.c.l.b16 %v93
    %v307 = vunpack.c.l.b16 %v94
    %v308 = vunpack.c.l.b16 %v95
    %v309 = vunpack.c.l.b16 %v96
    %v310 = vunpack.c.l.b16 %v97
    %v311 = vunpack.c.l.b16 %v98
    %v312 = vunpack.c.l.b16 %v99
    %v313 = vunpack.c.l.b16 %v100
    %v314 = vunpack.c.l.b16 %v101
    %v315 = vunpack.c.l.b16 %v102
    %v316 = vunpack.c.l.b16 %v103
    %v317 = vunpack.c.l.b16 %v104
    %v318 = vunpack.c.l.b16 %v105
    %v319 = vunpack.c.l.b16 %v106
    %v320 = vunpack.c.l.b16 %v107
    %v321 = vunpack.c.l.b16 %v108
    %v322 = vunpack.c.l.b16 %v109
    %v323 = vunpack.c.l.b16 %v110
    %v324 = vunpack.c.l.b16 %v111
    %v325 = vunpack.c.l.b16 %v112
    %v326 = vunpack.c.l.b16 %v113
    %v327 = vunpack.c.l.b16 %v114
    %v328 = vunpack.c.l.b16 %v115
    %v329 = vunpack.c.l.b16 %v116
    %v330 = vunpack.c.l.b16 %v117
    %v331 = vunpack.c.l.b16 %v118
    %v332 = vunpack.c.l.b16 %v119
    %v333 = vunpack.c.l.b16 %v120
    %v334 = vunpack.c.l.b16 %v121
    %v335 = vunpack.c.l.b16 %v122
    %v336 = vunpack.c.l.b16 %v123
    %v337 = vunpack.c.l.b16 %v124
    %v338 = vunpack.c.l.b16 %v125
    %v339 = vunpack.c.l.b16 %v126
    %v340 = vunpack.c.l.b16 %v127
    %v341 = vunpack.c.l.b16 %v128
    %v342 = vunpack.c.l.b16 %v129
    %v343 = vunpack.c.l.b16 %v130
    %v344 = vunpack.c.l.b16 %v131
    %v345 = vunpack.c.l.b16 %v132
    %v346 = vunpack.c.l.b16 %v133
    %v347 = vunpack.c.l.b16 %v134
    %v348 = vunpack.c.l.b16 %v135
    %v349 = vunpack.c.l.b16 %v136
    %v350 = vunpack.c.l.b16 %v137
    %v351 = vunpack.c.l.b16 %v138
    %v352 = vunpack.c.l.b16 %v139
    %v353 = vunpack.c.l.b16 %v140
    %v354 = vunpack.c.l.b16 %v141
    %v355 = vunpack.c.l.b16 %v142
    %v356 = vunpack.c.l.b16 %v143
    %v357 = vunpack.c.l.b16 %v144
    %v358 = vunpack.c.l.b16 %v145
    %v359 = vunpack.c.l.b16 %v146
    %v360 = vunpack.c.l.b16 %v147
    %v361 = vunpack.c.l.b16 %v148
    %v362 = vunpack.c.l.b16 %v149
    %v363 = vunpack.c.l.b16 %v150
    %v364 = vunpack.c.l.b16 %v151
    %v365 = vunpack.c.l.b16 %v152
    %v366 = vunpack.c.l.b16 %v153
    %v367 = vunpack.c.l.b16 %v154
    %v368 = vunpack.c.l.b16 %v155
    %v369 = vunpack.c.l.b16 %v156
    %v370 = vunpack.c.l.b16 %v157
    %v371 = vunpack.c.l.b16 %v158
    %v372 = vunpack.c.l.b16 %v159
    %v373 = vunpack.c.l.b16 %v160
    %v374 = vunpack.c.l.b16 %v161
    %v375 = vunpack.c.l.b16 %v162
    %v376 = vunpack.c.l.b16 %v163
    %v377 = vunpack.c.l.b16 %v164
    %v378 = vunpack.c.l.b16 %v165
    %v379 = vunpack.c.l.b16 %v166
    %v380 = vunpack.c.l.b16 %v167
    %v381 = vunpack.c.l.b16 %v168
    %v382 = vunpack.c.l.b16 %v169
    %v383 = vunpack.c.l.b16 %v170
    %v384 = vunpack.c.l.b16 %v171
    %v385 = vunpack.c.l.b16 %v172
    %v386 = vunpack.c.l.b16 %v173
    %v387 = vunpack.c.l.b16 %v174
    %v388 = vunpack.c.l.b16 %v175
    %v389 = vunpack.c.l.b16 %v176
    %v390 = vpack.c.b16 %v295, %v294
    %v391 = vpack.c.b16 %v297, %v296
    %v392 = vpack.c.b16 %v299, %v298
    %v393 = vpack.c.b16 %v301, %v300
    %v394 = vpack.c.b16 %v303, %v302
    %v395 = vpack.c.b16 %v305, %v304
    %v396 = vpack.c.b16 %v307, %v306
    %v397 = vpack.c.b16 %v309, %v308
    %v398 = vpack.c.b16 %v311, %v310
    %v399 = vpack.c.b16 %v313, %v312
    %v400 = vpack.c.b16 %v315, %v314
    %v401 = vpack.c.b16 %v317, %v316
    %v402 = vpack.c.b16 %v319, %v318
    %v403 = vpack.c.b16 %v321, %v320
    %v404 = vpack.c.b16 %v323, %v322
    %v405 = vpack.c.b16 %v325, %v324
    %v406 = vpack.c.b16 %v327, %v326
    %v407 = vpack.c.b16 %v329, %v328
    %v408 = vpack.c.b16 %v331, %v330
    %v409 = vpack.c.b16 %v333, %v332
    %v410 = vpack.c.b16 %v335, %v334
    %v411 = vpack.c.b16 %v337, %v336
    %v412 = vpack.c.b16 %v339, %v338
    %v413 = vpack.c.b16 %v341, %v340
    %v414 = vpack.c.b16 %v343, %v342
    %v415 = vpack.c.b16 %v345, %v344
    %v416 = vpack.c.b16 %v347, %v346
    %v417 = vpack.c.b16 %v349, %v348
    %v418 = vpack.c.b16 %v351, %v350
    %v419 = vpack.c.b16 %v353, %v352
    %v420 = vpack.c.b16 %v355, %v354
    %v421 = vpack.c.b16 %v357, %v356
    %v422 = vpack.c.b16 %v359, %v358
    %v423 = vpack.c.b16 %v361, %v360
    %v424 = vpack.c.b16 %v363, %v362
    %v425 = vpack.c.b16 %v365, %v364
    %v426 = vpack.c.b16 %v367, %v366
    %v427 = vpack.c.b16 %v369, %v368
    %v428 = vpack.c.b16 %v371, %v370
    %v429 = vpack.c.b16 %v373, %v372
    %v430 = vpack.c.b16 %v375, %v374
    %v431 = vpack.c.b16 %v377, %v376
    %v432 = vpack.c.b16 %v379, %v378
    %v433 = vpack.c.b16 %v381, %v380
    %v434 = vpack.c.b16 %v383, %v382
    %v435 = vpack.c.b16 %v385, %v384
    %v436 = vpack.c.b16 %v387, %v386
    %v437 = vpack.c.b16 %v389, %v388
    %486 = vmatprep.subr.bf16.mxu0 0
    %487 = vmatpush1.bf16.msra.mxu0 %v390
    %488 = vmatprep.subr.bf16.mxu0 0
    %489 = vmatpush1.bf16.msra.mxu0 %v391
    %490 = vmatprep.subr.bf16.mxu0 0
    %491 = vmatpush1.bf16.msra.mxu0 %v392
    %492 = vmatprep.subr.bf16.mxu0 0
    %493 = vmatpush1.bf16.msra.mxu0 %v393
    %494 = vmatprep.subr.bf16.mxu0 0
    %495 = vmatpush1.bf16.msra.mxu0 %v394
    %496 = vmatprep.subr.bf16.mxu0 0
    %497 = vmatpush1.bf16.msra.mxu0 %v395
    %498 = vmatprep.subr.bf16.mxu0 0
    %499 = vmatpush1.bf16.msra.mxu0 %v396
    %500 = vmatprep.subr.bf16.mxu0 0
    %501 = vmatpush1.bf16.msra.mxu0 %v397
    %502 = vmatprep.subr.bf16.mxu0 0
    %503 = vmatpush1.bf16.msra.mxu0 %v398
    %504 = vmatprep.subr.bf16.mxu0 0
    %505 = vmatpush1.bf16.msra.mxu0 %v399
    %506 = vmatprep.subr.bf16.mxu0 0
    %507 = vmatpush1.bf16.msra.mxu0 %v400
    %508 = vmatprep.subr.bf16.mxu0 0
    %509 = vmatpush1.bf16.msra.mxu0 %v401
    %510 = vmatprep.subr.bf16.mxu0 0
    %511 = vmatpush1.bf16.msra.mxu0 %v402
    %512 = vmatprep.subr.bf16.mxu0 0
    %513 = vmatpush1.bf16.msra.mxu0 %v403
    %514 = vmatprep.subr.bf16.mxu0 0
    %515 = vmatpush1.bf16.msra.mxu0 %v404
    %516 = vmatprep.subr.bf16.mxu0 0
    %517 = vmatpush1.bf16.msra.mxu0 %v405
    %518 = vmatprep.mubr.bf16.mxu0 %v187
    %519 = vmatmul.mubr.bf16.gmra.mrb[0].mxu0 %v186
    %v520 = vpop.f32.mrb[0].mxu0
    %v521 = vadd.f32 0.0, %v520
    %v522 = vpop.f32.mrb[0].mxu0
    %v523 = vpop.f32.mrb[0].mxu0
    %v524 = vpop.f32.mrb[0].mxu0
    %525 = vdwg.mxu0
    %526 = vmatprep.subr.bf16.mxu0 0
    %527 = vmatpush1.bf16.msra.mxu0 %v406
    %528 = vmatprep.subr.bf16.mxu0 0
    %529 = vmatpush1.bf16.msra.mxu0 %v407
    %530 = vmatprep.subr.bf16.mxu0 0
    %531 = vmatpush1.bf16.msra.mxu0 %v408
    %532 = vmatprep.subr.bf16.mxu0 0
    %533 = vmatpush1.bf16.msra.mxu0 %v409
    %534 = vmatprep.subr.bf16.mxu0 0
    %535 = vmatpush1.bf16.msra.mxu0 %v410
    %536 = vmatprep.subr.bf16.mxu0 0
    %537 = vmatpush1.bf16.msra.mxu0 %v411
    %538 = vmatprep.subr.bf16.mxu0 0
    %539 = vmatpush1.bf16.msra.mxu0 %v412
    %540 = vmatprep.subr.bf16.mxu0 0
    %541 = vmatpush1.bf16.msra.mxu0 %v413
    %542 = vmatprep.subr.bf16.mxu0 0
    %543 = vmatpush1.bf16.msra.mxu0 %v414
    %544 = vmatprep.subr.bf16.mxu0 0
    %545 = vmatpush1.bf16.msra.mxu0 %v415
    %546 = vmatprep.subr.bf16.mxu0 0
    %547 = vmatpush1.bf16.msra.mxu0 %v416
    %548 = vmatprep.subr.bf16.mxu0 0
    %549 = vmatpush1.bf16.msra.mxu0 %v417
    %550 = vmatprep.subr.bf16.mxu0 0
    %551 = vmatpush1.bf16.msra.mxu0 %v418
    %552 = vmatprep.subr.bf16.mxu0 0
    %553 = vmatpush1.bf16.msra.mxu0 %v419
    %554 = vmatprep.subr.bf16.mxu0 0
    %555 = vmatpush1.bf16.msra.mxu0 %v420
    %556 = vmatprep.subr.bf16.mxu0 0
    %557 = vmatpush1.bf16.msra.mxu0 %v421
    %558 = vmatprep.mubr.bf16.mxu0 %v189
    %559 = vmatmul.mubr.bf16.gmra.mrb[0].mxu0 %v188
    %v560 = vpop.f32.mrb[0].mxu0
    %v561 = vadd.f32 %v521, %v560
    %v562 = vpop.f32.mrb[0].mxu0
    %v563 = vpop.f32.mrb[0].mxu0
    %v564 = vpop.f32.mrb[0].mxu0
    %565 = vdwg.mxu0
    %566 = vmatprep.subr.bf16.mxu0 0
    %567 = vmatpush1.bf16.msra.mxu0 %v422
    %568 = vmatprep.subr.bf16.mxu0 0
    %569 = vmatpush1.bf16.msra.mxu0 %v423
    %570 = vmatprep.subr.bf16.mxu0 0
    %571 = vmatpush1.bf16.msra.mxu0 %v424
    %572 = vmatprep.subr.bf16.mxu0 0
    %573 = vmatpush1.bf16.msra.mxu0 %v425
    %574 = vmatprep.subr.bf16.mxu0 0
    %575 = vmatpush1.bf16.msra.mxu0 %v426
    %576 = vmatprep.subr.bf16.mxu0 0
    %577 = vmatpush1.bf16.msra.mxu0 %v427
    %578 = vmatprep.subr.bf16.mxu0 0
    %579 = vmatpush1.bf16.msra.mxu0 %v428
    %580 = vmatprep.subr.bf16.mxu0 0
    %581 = vmatpush1.bf16.msra.mxu0 %v429
    %582 = vmatprep.subr.bf16.mxu0 0
    %583 = vmatpush1.bf16.msra.mxu0 %v430
    %584 = vmatprep.subr.bf16.mxu0 0
    %585 = vmatpush1.bf16.msra.mxu0 %v431
    %586 = vmatprep.subr.bf16.mxu0 0
    %587 = vmatpush1.bf16.msra.mxu0 %v432
    %588 = vmatprep.subr.bf16.mxu0 0
    %589 = vmatpush1.bf16.msra.mxu0 %v433
    %590 = vmatprep.subr.bf16.mxu0 0
    %591 = vmatpush1.bf16.msra.mxu0 %v434
    %592 = vmatprep.subr.bf16.mxu0 0
    %593 = vmatpush1.bf16.msra.mxu0 %v435
    %594 = vmatprep.subr.bf16.mxu0 0
    %595 = vmatpush1.bf16.msra.mxu0 %v436
    %596 = vmatprep.subr.bf16.mxu0 0
    %597 = vmatpush1.bf16.msra.mxu0 %v437
    %598 = vmatprep.mubr.bf16.mxu0 %v191
    %599 = vmatmul.mubr.bf16.gmra.mrb[0].mxu0 %v190
    %v600 = vpop.f32.mrb[0].mxu0
    %v601 = vadd.f32 %v561, %v600
    %v602 = vpop.f32.mrb[0].mxu0
    %v603 = vpop.f32.mrb[0].mxu0
    %v604 = vpop.f32.mrb[0].mxu0
    %605 = vdwg.mxu0
    %v606 = vpack.c.bf16 %v601, %v601
    %v607 = vld [vmem:[#allocation7] sm:$0xff]
    %v608 = vld [vmem:[#allocation7 + $0x8] sm:$0xff]
    %v609 = vld [vmem:[#allocation7 + $0x10] sm:$0xff]
    %v610 = vld [vmem:[#allocation7 + $0x18] sm:$0xff]
    %v611 = vld [vmem:[#allocation7 + $0x20] sm:$0xff]
    %v612 = vld [vmem:[#allocation7 + $0x28] sm:$0xff]
    %v613 = vld [vmem:[#allocation7 + $0x30] sm:$0xff]
    %v614 = vld [vmem:[#allocation7 + $0x38] sm:$0xff]
    %v615 = vld [vmem:[#allocation7 + $0x40] sm:$0xff]
    %v616 = vld [vmem:[#allocation7 + $0x48] sm:$0xff]
    %v617 = vld [vmem:[#allocation7 + $0x50] sm:$0xff]
    %v618 = vld [vmem:[#allocation7 + $0x58] sm:$0xff]
    %v619 = vld [vmem:[#allocation7 + $0x60] sm:$0xff]
    %v620 = vld [vmem:[#allocation7 + $0x68] sm:$0xff]
    %v621 = vld [vmem:[#allocation7 + $0x70] sm:$0xff]
    %v622 = vld [vmem:[#allocation7 + $0x78] sm:$0xff]
    %v623 = vld [vmem:[#allocation7 + $0x80] sm:$0xff]
    %v624 = vld [vmem:[#allocation7 + $0x88] sm:$0xff]
    %v625 = vld [vmem:[#allocation7 + $0x90] sm:$0xff]
    %v626 = vld [vmem:[#allocation7 + $0x98] sm:$0xff]
    %v627 = vld [vmem:[#allocation7 + $0xa0] sm:$0xff]
    %v628 = vld [vmem:[#allocation7 + $0xa8] sm:$0xff]
    %v629 = vld [vmem:[#allocation7 + $0xb0] sm:$0xff]
    %v630 = vld [vmem:[#allocation7 + $0xb8] sm:$0xff]
    %v631 = vld [vmem:[#allocation7 + $0xc0] sm:$0xff]
    %v632 = vld [vmem:[#allocation7 + $0xc8] sm:$0xff]
    %v633 = vld [vmem:[#allocation7 + $0xd0] sm:$0xff]
    %v634 = vld [vmem:[#allocation7 + $0xd8] sm:$0xff]
    %v635 = vld [vmem:[#allocation7 + $0xe0] sm:$0xff]
    %v636 = vld [vmem:[#allocation7 + $0xe8] sm:$0xff]
    %v637 = vld [vmem:[#allocation7 + $0xf0] sm:$0xff]
    %v638 = vld [vmem:[#allocation7 + $0xf8] sm:$0xff]
    %v639 = vld [vmem:[%s3] sm:$0xf]
    %v641 = vlaneseq
    %v642 = vshrl.u32 %v641, 7
    %v643 = vsub.s32 0, %v642
    %v644 = vrot.slane %v639, %v643
    %v645 = vlaneseq
    %v646 = vshrl.u32 %v645, 7
    %v647 = vsub.s32 1, %v646
    %v648 = vrot.slane %v639, %v647
    %v649 = vlaneseq
    %v650 = vshrl.u32 %v649, 7
    %v651 = vsub.s32 2, %v650
    %v652 = vrot.slane %v639, %v651
    %v653 = vlaneseq
    %v654 = vshrl.u32 %v653, 7
    %v655 = vsub.s32 3, %v654
    %v656 = vrot.slane %v639, %v655
    %v693 = vunpack.c.l.b16 %v607
    %v694 = vunpack.c.h.b16 %v607
    %v695 = vunpack.c.l.b16 %v608
    %v696 = vunpack.c.h.b16 %v608
    %v697 = vunpack.c.l.b16 %v609
    %v698 = vunpack.c.h.b16 %v609
    %v699 = vunpack.c.l.b16 %v610
    %v700 = vunpack.c.h.b16 %v610
    %v701 = vunpack.c.l.b16 %v611
    %v702 = vunpack.c.h.b16 %v611
    %v703 = vunpack.c.l.b16 %v612
    %v704 = vunpack.c.h.b16 %v612
    %v705 = vunpack.c.l.b16 %v613
    %v706 = vunpack.c.h.b16 %v613
    %v707 = vunpack.c.l.b16 %v614
    %v708 = vunpack.c.h.b16 %v614
    %v709 = vunpack.c.l.b16 %v615
    %v710 = vunpack.c.h.b16 %v615
    %v711 = vunpack.c.l.b16 %v616
    %v712 = vunpack.c.h.b16 %v616
    %v713 = vunpack.c.l.b16 %v617
    %v714 = vunpack.c.h.b16 %v617
    %v715 = vunpack.c.l.b16 %v618
    %v716 = vunpack.c.h.b16 %v618
    %v717 = vunpack.c.l.b16 %v619
    %v718 = vunpack.c.h.b16 %v619
    %v719 = vunpack.c.l.b16 %v620
    %v720 = vunpack.c.h.b16 %v620
    %v721 = vunpack.c.l.b16 %v621
    %v722 = vunpack.c.h.b16 %v621
    %v723 = vunpack.c.l.b16 %v622
    %v724 = vunpack.c.h.b16 %v622
    %v725 = vunpack.c.l.b16 %v623
    %v726 = vunpack.c.h.b16 %v623
    %v727 = vunpack.c.l.b16 %v624
    %v728 = vunpack.c.h.b16 %v624
    %v729 = vunpack.c.l.b16 %v625
    %v730 = vunpack.c.h.b16 %v625
    %v731 = vunpack.c.l.b16 %v626
    %v732 = vunpack.c.h.b16 %v626
    %v733 = vunpack.c.l.b16 %v627
    %v734 = vunpack.c.h.b16 %v627
    %v735 = vunpack.c.l.b16 %v628
    %v736 = vunpack.c.h.b16 %v628
    %v737 = vunpack.c.l.b16 %v629
    %v738 = vunpack.c.h.b16 %v629
    %v739 = vunpack.c.l.b16 %v630
    %v740 = vunpack.c.h.b16 %v630
    %v741 = vunpack.c.l.b16 %v631
    %v742 = vunpack.c.h.b16 %v631
    %v743 = vunpack.c.l.b16 %v632
    %v744 = vunpack.c.h.b16 %v632
    %v745 = vunpack.c.l.b16 %v633
    %v746 = vunpack.c.h.b16 %v633
    %v747 = vunpack.c.l.b16 %v634
    %v748 = vunpack.c.h.b16 %v634
    %v749 = vunpack.c.l.b16 %v635
    %v750 = vunpack.c.h.b16 %v635
    %v751 = vunpack.c.l.b16 %v636
    %v752 = vunpack.c.h.b16 %v636
    %v753 = vunpack.c.l.b16 %v637
    %v754 = vunpack.c.h.b16 %v637
    %v755 = vunpack.c.l.b16 %v638
    %v756 = vunpack.c.h.b16 %v638
    %v757 = vpack.c.b16 %v697, %v693
    %v758 = vpack.c.b16 %v698, %v694
    %v759 = vpack.c.b16 %v699, %v695
    %v760 = vpack.c.b16 %v700, %v696
    %v761 = vpack.c.b16 %v705, %v701
    %v762 = vpack.c.b16 %v706, %v702
    %v763 = vpack.c.b16 %v707, %v703
    %v764 = vpack.c.b16 %v708, %v704
    %v765 = vpack.c.b16 %v713, %v709
    %v766 = vpack.c.b16 %v714, %v710
    %v767 = vpack.c.b16 %v715, %v711
    %v768 = vpack.c.b16 %v716, %v712
    %v769 = vpack.c.b16 %v721, %v717
    %v770 = vpack.c.b16 %v722, %v718
    %v771 = vpack.c.b16 %v723, %v719
    %v772 = vpack.c.b16 %v724, %v720
    %v773 = vpack.c.b16 %v729, %v725
    %v774 = vpack.c.b16 %v730, %v726
    %v775 = vpack.c.b16 %v731, %v727
    %v776 = vpack.c.b16 %v732, %v728
    %v777 = vpack.c.b16 %v737, %v733
    %v778 = vpack.c.b16 %v738, %v734
    %v779 = vpack.c.b16 %v739, %v735
    %v780 = vpack.c.b16 %v740, %v736
    %v781 = vpack.c.b16 %v745, %v741
    %v782 = vpack.c.b16 %v746, %v742
    %v783 = vpack.c.b16 %v747, %v743
    %v784 = vpack.c.b16 %v748, %v744
    %v785 = vpack.c.b16 %v753, %v749
    %v786 = vpack.c.b16 %v754, %v750
    %v787 = vpack.c.b16 %v755, %v751
    %v788 = vpack.c.b16 %v756, %v752
    %821 = vmatprep.subr.bf16.mxu0 %v758
    %822 = vmatpush1.bf16.msra.mxu0 %v757
    %823 = vmatprep.subr.bf16.mxu0 %v762
    %824 = vmatpush1.bf16.msra.mxu0 %v761
    %825 = vmatprep.subr.bf16.mxu0 %v766
    %826 = vmatpush1.bf16.msra.mxu0 %v765
    %827 = vmatprep.subr.bf16.mxu0 %v770
    %828 = vmatpush1.bf16.msra.mxu0 %v769
    %829 = vmatprep.subr.bf16.mxu0 %v774
    %830 = vmatpush1.bf16.msra.mxu0 %v773
    %831 = vmatprep.subr.bf16.mxu0 %v778
    %832 = vmatpush1.bf16.msra.mxu0 %v777
    %833 = vmatprep.subr.bf16.mxu0 %v782
    %834 = vmatpush1.bf16.msra.mxu0 %v781
    %835 = vmatprep.subr.bf16.mxu0 %v786
    %836 = vmatpush1.bf16.msra.mxu0 %v785
    %837 = vmatprep.subr.bf16.mxu0 0
    %838 = vmatpush1.bf16.msra.mxu0 0
    %839 = vmatprep.subr.bf16.mxu0 0
    %840 = vmatpush1.bf16.msra.mxu0 0
    %841 = vmatprep.subr.bf16.mxu0 0
    %842 = vmatpush1.bf16.msra.mxu0 0
    %843 = vmatprep.subr.bf16.mxu0 0
    %844 = vmatpush1.bf16.msra.mxu0 0
    %845 = vmatprep.subr.bf16.mxu0 0
    %846 = vmatpush1.bf16.msra.mxu0 0
    %847 = vmatprep.subr.bf16.mxu0 0
    %848 = vmatpush1.bf16.msra.mxu0 0
    %849 = vmatprep.subr.bf16.mxu0 0
    %850 = vmatpush1.bf16.msra.mxu0 0
    %851 = vmatprep.subr.bf16.mxu0 0
    %852 = vmatpush1.bf16.msra.mxu0 0
    %853 = vmatprep.mubr.bf16.mxu0 0
    %854 = vmatmul.mubr.bf16.gmra.mrb[0].mxu0 %v606
    %v855 = vpop.f32.mrb[0].mxu0
    %v856 = vadd.f32 %v644, %v855
    %v857 = vpop.f32.mrb[0].mxu0
    %v858 = vadd.f32 %v648, %v857
    %v859 = vpop.f32.mrb[0].mxu0
    %v860 = vpop.f32.mrb[0].mxu0
    %861 = vdwg.mxu0
    %862 = vmatprep.subr.bf16.mxu0 %v760
    %863 = vmatpush1.bf16.msra.mxu0 %v759
    %864 = vmatprep.subr.bf16.mxu0 %v764
    %865 = vmatpush1.bf16.msra.mxu0 %v763
    %866 = vmatprep.subr.bf16.mxu0 %v768
    %867 = vmatpush1.bf16.msra.mxu0 %v767
    %868 = vmatprep.subr.bf16.mxu0 %v772
    %869 = vmatpush1.bf16.msra.mxu0 %v771
    %870 = vmatprep.subr.bf16.mxu0 %v776
    %871 = vmatpush1.bf16.msra.mxu0 %v775
    %872 = vmatprep.subr.bf16.mxu0 %v780
    %873 = vmatpush1.bf16.msra.mxu0 %v779
    %874 = vmatprep.subr.bf16.mxu0 %v784
    %875 = vmatpush1.bf16.msra.mxu0 %v783
    %876 = vmatprep.subr.bf16.mxu0 %v788
    %877 = vmatpush1.bf16.msra.mxu0 %v787
    %878 = vmatprep.subr.bf16.mxu0 0
    %879 = vmatpush1.bf16.msra.mxu0 0
    %880 = vmatprep.subr.bf16.mxu0 0
    %881 = vmatpush1.bf16.msra.mxu0 0
    %882 = vmatprep.subr.bf16.mxu0 0
    %883 = vmatpush1.bf16.msra.mxu0 0
    %884 = vmatprep.subr.bf16.mxu0 0
    %885 = vmatpush1.bf16.msra.mxu0 0
    %886 = vmatprep.subr.bf16.mxu0 0
    %887 = vmatpush1.bf16.msra.mxu0 0
    %888 = vmatprep.subr.bf16.mxu0 0
    %889 = vmatpush1.bf16.msra.mxu0 0
    %890 = vmatprep.subr.bf16.mxu0 0
    %891 = vmatpush1.bf16.msra.mxu0 0
    %892 = vmatprep.subr.bf16.mxu0 0
    %893 = vmatpush1.bf16.msra.mxu0 0
    %894 = vmatprep.mubr.bf16.mxu0 0
    %895 = vmatmul.mubr.bf16.gmra.mrb[0].mxu0 %v606
    %v896 = vpop.f32.mrb[0].mxu0
    %v897 = vadd.f32 %v652, %v896
    %v898 = vpop.f32.mrb[0].mxu0
    %v899 = vadd.f32 %v656, %v898
    %v900 = vpop.f32.mrb[0].mxu0
    %v901 = vpop.f32.mrb[0].mxu0
    %902 = vdwg.mxu0
    %v903 = vpack.c.bf16 %v856, %v856
    %v904 = vpack.c.bf16 %v858, %v858
    %v905 = vpack.c.bf16 %v897, %v897
    %v906 = vpack.c.bf16 %v899, %v899
    %v907 = vld [vmem:[#allocation8] sm:$0xf]
    %v908 = vld [vmem:[#allocation8 + $0x4] sm:$0xf]
    %v909 = vld [vmem:[#allocation8 + $0x8] sm:$0xf]
    %v910 = vld [vmem:[#allocation8 + $0xc] sm:$0xf]
    %v911 = vld [vmem:[#allocation8 + $0x10] sm:$0xf]
    %v912 = vld [vmem:[#allocation8 + $0x14] sm:$0xf]
    %v913 = vld [vmem:[#allocation8 + $0x18] sm:$0xf]
    %v914 = vld [vmem:[#allocation8 + $0x1c] sm:$0xf]
    %v915 = vld [vmem:[#allocation8 + $0x20] sm:$0xf]
    %v916 = vld [vmem:[#allocation8 + $0x24] sm:$0xf]
    %v917 = vld [vmem:[#allocation8 + $0x28] sm:$0xf]
    %v918 = vld [vmem:[#allocation8 + $0x2c] sm:$0xf]
    %v919 = vld [vmem:[#allocation8 + $0x30] sm:$0xf]
    %v920 = vld [vmem:[#allocation8 + $0x34] sm:$0xf]
    %v921 = vld [vmem:[#allocation8 + $0x38] sm:$0xf]
    %v922 = vld [vmem:[#allocation8 + $0x3c] sm:$0xf]
    %v923 = vld [vmem:[#allocation8 + $0x40] sm:$0xf]
    %v924 = vld [vmem:[#allocation8 + $0x44] sm:$0xf]
    %v925 = vld [vmem:[#allocation8 + $0x48] sm:$0xf]
    %v926 = vld [vmem:[#allocation8 + $0x4c] sm:$0xf]
    %v927 = vld [vmem:[#allocation8 + $0x50] sm:$0xf]
    %v928 = vld [vmem:[#allocation8 + $0x54] sm:$0xf]
    %v929 = vld [vmem:[#allocation8 + $0x58] sm:$0xf]
    %v930 = vld [vmem:[#allocation8 + $0x5c] sm:$0xf]
    %v931 = vld [vmem:[#allocation8 + $0x60] sm:$0xf]
    %v932 = vld [vmem:[#allocation8 + $0x64] sm:$0xf]
    %v933 = vld [vmem:[#allocation8 + $0x68] sm:$0xf]
    %v934 = vld [vmem:[#allocation8 + $0x6c] sm:$0xf]
    %v935 = vld [vmem:[#allocation8 + $0x70] sm:$0xf]
    %v936 = vld [vmem:[#allocation8 + $0x74] sm:$0xf]
    %v937 = vld [vmem:[#allocation8 + $0x78] sm:$0xf]
    %v938 = vld [vmem:[#allocation8 + $0x7c] sm:$0xf]
    %v939 = vld [vmem:[#allocation8 + $0x80] sm:$0xf]
    %v940 = vld [vmem:[#allocation8 + $0x84] sm:$0xf]
    %v941 = vld [vmem:[#allocation8 + $0x88] sm:$0xf]
    %v942 = vld [vmem:[#allocation8 + $0x8c] sm:$0xf]
    %v943 = vld [vmem:[#allocation8 + $0x90] sm:$0xf]
    %v944 = vld [vmem:[#allocation8 + $0x94] sm:$0xf]
    %v945 = vld [vmem:[#allocation8 + $0x98] sm:$0xf]
    %v946 = vld [vmem:[#allocation8 + $0x9c] sm:$0xf]
    %v947 = vld [vmem:[#allocation8 + $0xa0] sm:$0xf]
    %v948 = vld [vmem:[#allocation8 + $0xa4] sm:$0xf]
    %v949 = vld [vmem:[#allocation8 + $0xa8] sm:$0xf]
    %v950 = vld [vmem:[#allocation8 + $0xac] sm:$0xf]
    %v951 = vld [vmem:[#allocation8 + $0xb0] sm:$0xf]
    %v952 = vld [vmem:[#allocation8 + $0xb4] sm:$0xf]
    %v953 = vld [vmem:[#allocation8 + $0xb8] sm:$0xf]
    %v954 = vld [vmem:[#allocation8 + $0xbc] sm:$0xf]
    %v955 = vld [vmem:[#allocation8 + $0xc0] sm:$0xf]
    %v956 = vld [vmem:[#allocation8 + $0xc4] sm:$0xf]
    %v957 = vld [vmem:[#allocation8 + $0xc8] sm:$0xf]
    %v958 = vld [vmem:[#allocation8 + $0xcc] sm:$0xf]
    %v959 = vld [vmem:[#allocation8 + $0xd0] sm:$0xf]
    %v960 = vld [vmem:[#allocation8 + $0xd4] sm:$0xf]
    %v961 = vld [vmem:[#allocation8 + $0xd8] sm:$0xf]
    %v962 = vld [vmem:[#allocation8 + $0xdc] sm:$0xf]
    %v963 = vld [vmem:[#allocation8 + $0xe0] sm:$0xf]
    %v964 = vld [vmem:[#allocation8 + $0xe4] sm:$0xf]
    %v965 = vld [vmem:[#allocation8 + $0xe8] sm:$0xf]
    %v966 = vld [vmem:[#allocation8 + $0xec] sm:$0xf]
    %v967 = vld [vmem:[#allocation8 + $0xf0] sm:$0xf]
    %v968 = vld [vmem:[#allocation8 + $0xf4] sm:$0xf]
    %v969 = vld [vmem:[#allocation8 + $0xf8] sm:$0xf]
    %v970 = vld [vmem:[#allocation8 + $0xfc] sm:$0xf]
    %v971 = vld [vmem:[%s5] sm:$0x1]
    %v973 = vlaneseq
    %v974 = vshrl.u32 %v973, 7
    %v975 = vsub.s32 0, %v974
    %v976 = vrot.slane %v971, %v975
    %v1042 = vunpack.c.l.b16 %v907
    %v1043 = vunpack.c.l.b16 %v908
    %v1044 = vunpack.c.l.b16 %v909
    %v1045 = vunpack.c.l.b16 %v910
    %v1046 = vunpack.c.l.b16 %v911
    %v1047 = vunpack.c.l.b16 %v912
    %v1048 = vunpack.c.l.b16 %v913
    %v1049 = vunpack.c.l.b16 %v914
    %v1050 = vunpack.c.l.b16 %v915
    %v1051 = vunpack.c.l.b16 %v916
    %v1052 = vunpack.c.l.b16 %v917
    %v1053 = vunpack.c.l.b16 %v918
    %v1054 = vunpack.c.l.b16 %v919
    %v1055 = vunpack.c.l.b16 %v920
    %v1056 = vunpack.c.l.b16 %v921
    %v1057 = vunpack.c.l.b16 %v922
    %v1058 = vunpack.c.l.b16 %v923
    %v1059 = vunpack.c.l.b16 %v924
    %v1060 = vunpack.c.l.b16 %v925
    %v1061 = vunpack.c.l.b16 %v926
    %v1062 = vunpack.c.l.b16 %v927
    %v1063 = vunpack.c.l.b16 %v928
    %v1064 = vunpack.c.l.b16 %v929
    %v1065 = vunpack.c.l.b16 %v930
    %v1066 = vunpack.c.l.b16 %v931
    %v1067 = vunpack.c.l.b16 %v932
    %v1068 = vunpack.c.l.b16 %v933
    %v1069 = vunpack.c.l.b16 %v934
    %v1070 = vunpack.c.l.b16 %v935
    %v1071 = vunpack.c.l.b16 %v936
    %v1072 = vunpack.c.l.b16 %v937
    %v1073 = vunpack.c.l.b16 %v938
    %v1074 = vunpack.c.l.b16 %v939
    %v1075 = vunpack.c.l.b16 %v940
    %v1076 = vunpack.c.l.b16 %v941
    %v1077 = vunpack.c.l.b16 %v942
    %v1078 = vunpack.c.l.b16 %v943
    %v1079 = vunpack.c.l.b16 %v944
    %v1080 = vunpack.c.l.b16 %v945
    %v1081 = vunpack.c.l.b16 %v946
    %v1082 = vunpack.c.l.b16 %v947
    %v1083 = vunpack.c.l.b16 %v948
    %v1084 = vunpack.c.l.b16 %v949
    %v1085 = vunpack.c.l.b16 %v950
    %v1086 = vunpack.c.l.b16 %v951
    %v1087 = vunpack.c.l.b16 %v952
    %v1088 = vunpack.c.l.b16 %v953
    %v1089 = vunpack.c.l.b16 %v954
    %v1090 = vunpack.c.l.b16 %v955
    %v1091 = vunpack.c.l.b16 %v956
    %v1092 = vunpack.c.l.b16 %v957
    %v1093 = vunpack.c.l.b16 %v958
    %v1094 = vunpack.c.l.b16 %v959
    %v1095 = vunpack.c.l.b16 %v960
    %v1096 = vunpack.c.l.b16 %v961
    %v1097 = vunpack.c.l.b16 %v962
    %v1098 = vunpack.c.l.b16 %v963
    %v1099 = vunpack.c.l.b16 %v964
    %v1100 = vunpack.c.l.b16 %v965
    %v1101 = vunpack.c.l.b16 %v966
    %v1102 = vunpack.c.l.b16 %v967
    %v1103 = vunpack.c.l.b16 %v968
    %v1104 = vunpack.c.l.b16 %v969
    %v1105 = vunpack.c.l.b16 %v970
    %v1106 = vpack.c.b16 %v1043, %v1042
    %v1107 = vpack.c.b16 %v1045, %v1044
    %v1108 = vpack.c.b16 %v1047, %v1046
    %v1109 = vpack.c.b16 %v1049, %v1048
    %v1110 = vpack.c.b16 %v1051, %v1050
    %v1111 = vpack.c.b16 %v1053, %v1052
    %v1112 = vpack.c.b16 %v1055, %v1054
    %v1113 = vpack.c.b16 %v1057, %v1056
    %v1114 = vpack.c.b16 %v1059, %v1058
    %v1115 = vpack.c.b16 %v1061, %v1060
    %v1116 = vpack.c.b16 %v1063, %v1062
    %v1117 = vpack.c.b16 %v1065, %v1064
    %v1118 = vpack.c.b16 %v1067, %v1066
    %v1119 = vpack.c.b16 %v1069, %v1068
    %v1120 = vpack.c.b16 %v1071, %v1070
    %v1121 = vpack.c.b16 %v1073, %v1072
    %v1122 = vpack.c.b16 %v1075, %v1074
    %v1123 = vpack.c.b16 %v1077, %v1076
    %v1124 = vpack.c.b16 %v1079, %v1078
    %v1125 = vpack.c.b16 %v1081, %v1080
    %v1126 = vpack.c.b16 %v1083, %v1082
    %v1127 = vpack.c.b16 %v1085, %v1084
    %v1128 = vpack.c.b16 %v1087, %v1086
    %v1129 = vpack.c.b16 %v1089, %v1088
    %v1130 = vpack.c.b16 %v1091, %v1090
    %v1131 = vpack.c.b16 %v1093, %v1092
    %v1132 = vpack.c.b16 %v1095, %v1094
    %v1133 = vpack.c.b16 %v1097, %v1096
    %v1134 = vpack.c.b16 %v1099, %v1098
    %v1135 = vpack.c.b16 %v1101, %v1100
    %v1136 = vpack.c.b16 %v1103, %v1102
    %v1137 = vpack.c.b16 %v1105, %v1104
    %1170 = vmatprep.subr.bf16.mxu0 0
    %1171 = vmatpush1.bf16.msra.mxu0 %v1106
    %1172 = vmatprep.subr.bf16.mxu0 0
    %1173 = vmatpush1.bf16.msra.mxu0 %v1107
    %1174 = vmatprep.subr.bf16.mxu0 0
    %1175 = vmatpush1.bf16.msra.mxu0 %v1108
    %1176 = vmatprep.subr.bf16.mxu0 0
    %1177 = vmatpush1.bf16.msra.mxu0 %v1109
    %1178 = vmatprep.subr.bf16.mxu0 0
    %1179 = vmatpush1.bf16.msra.mxu0 %v1110
    %1180 = vmatprep.subr.bf16.mxu0 0
    %1181 = vmatpush1.bf16.msra.mxu0 %v1111
    %1182 = vmatprep.subr.bf16.mxu0 0
    %1183 = vmatpush1.bf16.msra.mxu0 %v1112
    %1184 = vmatprep.subr.bf16.mxu0 0
    %1185 = vmatpush1.bf16.msra.mxu0 %v1113
    %1186 = vmatprep.subr.bf16.mxu0 0
    %1187 = vmatpush1.bf16.msra.mxu0 %v1114
    %1188 = vmatprep.subr.bf16.mxu0 0
    %1189 = vmatpush1.bf16.msra.mxu0 %v1115
    %1190 = vmatprep.subr.bf16.mxu0 0
    %1191 = vmatpush1.bf16.msra.mxu0 %v1116
    %1192 = vmatprep.subr.bf16.mxu0 0
    %1193 = vmatpush1.bf16.msra.mxu0 %v1117
    %1194 = vmatprep.subr.bf16.mxu0 0
    %1195 = vmatpush1.bf16.msra.mxu0 %v1118
    %1196 = vmatprep.subr.bf16.mxu0 0
    %1197 = vmatpush1.bf16.msra.mxu0 %v1119
    %1198 = vmatprep.subr.bf16.mxu0 0
    %1199 = vmatpush1.bf16.msra.mxu0 %v1120
    %1200 = vmatprep.subr.bf16.mxu0 0
    %1201 = vmatpush1.bf16.msra.mxu0 %v1121
    %1202 = vmatprep.mubr.bf16.mxu0 %v904
    %1203 = vmatmul.mubr.bf16.gmra.mrb[0].mxu0 %v903
    %v1204 = vpop.f32.mrb[0].mxu0
    %v1205 = vadd.f32 %v976, %v1204
    %v1206 = vpop.f32.mrb[0].mxu0
    %v1207 = vpop.f32.mrb[0].mxu0
    %v1208 = vpop.f32.mrb[0].mxu0
    %1209 = vdwg.mxu0
    %1210 = vmatprep.subr.bf16.mxu0 0
    %1211 = vmatpush1.bf16.msra.mxu0 %v1122
    %1212 = vmatprep.subr.bf16.mxu0 0
    %1213 = vmatpush1.bf16.msra.mxu0 %v1123
    %1214 = vmatprep.subr.bf16.mxu0 0
    %1215 = vmatpush1.bf16.msra.mxu0 %v1124
    %1216 = vmatprep.subr.bf16.mxu0 0
    %1217 = vmatpush1.bf16.msra.mxu0 %v1125
    %1218 = vmatprep.subr.bf16.mxu0 0
    %1219 = vmatpush1.bf16.msra.mxu0 %v1126
    %1220 = vmatprep.subr.bf16.mxu0 0
    %1221 = vmatpush1.bf16.msra.mxu0 %v1127
    %1222 = vmatprep.subr.bf16.mxu0 0
    %1223 = vmatpush1.bf16.msra.mxu0 %v1128
    %1224 = vmatprep.subr.bf16.mxu0 0
    %1225 = vmatpush1.bf16.msra.mxu0 %v1129
    %1226 = vmatprep.subr.bf16.mxu0 0
    %1227 = vmatpush1.bf16.msra.mxu0 %v1130
    %1228 = vmatprep.subr.bf16.mxu0 0
    %1229 = vmatpush1.bf16.msra.mxu0 %v1131
    %1230 = vmatprep.subr.bf16.mxu0 0
    %1231 = vmatpush1.bf16.msra.mxu0 %v1132
    %1232 = vmatprep.subr.bf16.mxu0 0
    %1233 = vmatpush1.bf16.msra.mxu0 %v1133
    %1234 = vmatprep.subr.bf16.mxu0 0
    %1235 = vmatpush1.bf16.msra.mxu0 %v1134
    %1236 = vmatprep.subr.bf16.mxu0 0
    %1237 = vmatpush1.bf16.msra.mxu0 %v1135
    %1238 = vmatprep.subr.bf16.mxu0 0
    %1239 = vmatpush1.bf16.msra.mxu0 %v1136
    %1240 = vmatprep.subr.bf16.mxu0 0
    %1241 = vmatpush1.bf16.msra.mxu0 %v1137
    %1242 = vmatprep.mubr.bf16.mxu0 %v906
    %1243 = vmatmul.mubr.bf16.gmra.mrb[0].mxu0 %v905
    %v1244 = vpop.f32.mrb[0].mxu0
    %v1245 = vadd.f32 %v1205, %v1244
    %v1246 = vpop.f32.mrb[0].mxu0
    %v1247 = vpop.f32.mrb[0].mxu0
    %v1248 = vpop.f32.mrb[0].mxu0
    %1249 = vdwg.mxu0
    %1250 = vst [vmem:[#allocation10] sm:$0xff] %v1245
    // Predicated region
    $region42: #{tpu_custom_call.1} parent=1 // pred_check
      _
    $region43: #{tpu_custom_call.1} parent=1 // pred_check_branch
      %1252 = sbr.rel (0) target = $region45
    $region44: #{tpu_custom_call.1} parent=1 // pred_region
      %s1254 = ssub.s32 128, 128
      %1255 = vsyncadd [#allocation4], %s1254
      %s1257 = sshll.u32 [#allocation10], 4
      %s1258 = int_to_ptr.vmem [resolvable:$true] %s1257
      %1260 = dma.vmem_to_hbm [thread:$0]  %s1258, 128, %s6, [#allocation4]
    $region45: #{tpu_custom_call.1} parent=1 // pred_fallthru
      _
    // Predicated region
    $region46: #{tpu_custom_call.1} parent=1 // pred_check
      _
    $region47: #{tpu_custom_call.1} parent=1 // pred_check_branch
      %1262 = sbr.rel (0) target = $region49
    $region48: #{tpu_custom_call.1} parent=1 // pred_region
      %1263 = dma.done [#allocation4], 128
    $region49: #{tpu_custom_call.1} parent=1 // pred_fallthru
      _
    %1264 = vsyncpa [#allocation3], 1
    %1265 = vsyncpa [#allocation6], 1
    %1266 = vsyncpa [#allocation9], 1
    %1267 = vsyncpa [#allocation4], 1

</llo_original>
